<compile_context>
chip_gen: v6e
topology: v6e:2x2x1
jax: 0.10.0
libtpu: 0.0.40
codegen_flags: <defaults>
</compile_context>

<pallas_src>
import functools
import math

import jax
import jax.numpy as jnp
from jax.experimental import pallas as pl
from jax.experimental.pallas import tpu as pltpu


def make_pe(d_model, max_len=5000, dtype=jnp.float32):
    """Sin/cos positional-encoding table, shape (max_len, d_model)."""
    position = jnp.arange(max_len, dtype=jnp.float32)[:, None]               # (L, 1)
    div_term = jnp.exp(
        jnp.arange(0, d_model, 2, dtype=jnp.float32) * (-math.log(10000.0) / d_model)
    )                                                                         # (D/2,)
    pe = jnp.zeros((max_len, d_model), dtype=jnp.float32)
    pe = pe.at[:, 0::2].set(jnp.sin(position * div_term))
    pe = pe.at[:, 1::2].set(jnp.cos(position * div_term))
    return pe.astype(dtype)


def _pe_add_dropout_kernel(*refs, batch, keep_threshold, scale, training):
    """One grid step: a (TS, B*D) slab of x (+ optional dropout bits)."""
    if training:
        x_ref, pe_ref, bits_ref, o_ref = refs
    else:
        x_ref, pe_ref, o_ref = refs

    x = x_ref[...]                                      # (TS, B*D)
    pe = pe_ref[...]                                    # (TS, D)
    if batch > 1:
        pe = jnp.tile(pe, (1, batch))                   # replicate across batch lanes
    y = x + pe.astype(x.dtype)

    if training:
        # Integer-domain inverted dropout: drop iff bits < p * 2^32.
        keep = bits_ref[...] >= jnp.uint32(keep_threshold)
        y = jnp.where(keep, y * jnp.asarray(scale, y.dtype), jnp.zeros_like(y))

    o_ref[...] = y.astype(o_ref.dtype)


def _choose_block_rows(S, row_bytes, target_bytes=(3 << 19)):  # ~1.5 MiB / stream
    ts = max(1, target_bytes // max(int(row_bytes), 1))
    if ts < S:
        # Multiple of 8 so the sublane axis of every tile stays aligned.
        return min(S, max(8, (ts // 8) * 8))
    # Whole array fits one tile: still keep >= 2 parallel grid steps when S
    # allows, so both v7x TensorCores get work.
    if S >= 16:
        return ((S + 1) // 2 + 7) // 8 * 8
    return S


def positional_encoding_forward(x, pe, *, p=0.1, training=True, key=None,
                                block_rows=None):
    """x: (S, B, D), pe: (max_len, D).  Returns dropout(x + pe[:S, None, :])."""
    S, B, D = x.shape
    assert pe.shape[1] == D and pe.shape[0] >= S

    x2 = x.reshape(S, B * D)                 # sublane axis = S, lane axis = B*D
    pe2 = pe[:S].astype(x.dtype)             # (S, D); batch broadcast done in-kernel

    apply_dropout = bool(training) and float(p) > 0.0
    keep_threshold = min(int(round(float(p) * (1 << 32))), (1 << 32) - 1)
    scale = 1.0 / (1.0 - float(p)) if apply_dropout else 1.0

    if block_rows is None:
        # Size against the widest per-row stream (dropout bits are 4 B/elem).
        bytes_per_row = B * D * max(x.dtype.itemsize, 4)
        block_rows = _choose_block_rows(S, bytes_per_row)
    ts = int(min(block_rows, S))
    grid = (pl.cdiv(S, ts),)

    in_specs = [
        pl.BlockSpec((ts, B * D), lambda i: (i, 0)),    # x slab
        pl.BlockSpec((ts, D), lambda i: (i, 0)),        # pe rows
    ]
    args = [x2, pe2]
    if apply_dropout:
        if key is None:
            key = jax.random.PRNGKey(0)
        bits = jax.random.bits(key, (S, B * D), dtype=jnp.uint32)
        in_specs.append(pl.BlockSpec((ts, B * D), lambda i: (i, 0)))
        args.append(bits)

    kernel = functools.partial(
        _pe_add_dropout_kernel,
        batch=B, keep_threshold=keep_threshold, scale=scale, training=apply_dropout)

    out2 = pl.pallas_call(
        kernel,
        out_shape=jax.ShapeDtypeStruct((S, B * D), x.dtype),
        grid=grid,
        in_specs=in_specs,
        out_specs=pl.BlockSpec((ts, B * D), lambda i: (i, 0)),
        compiler_params=pltpu.CompilerParams(dimension_semantics=("parallel",)),
    )(*args)
    return out2.reshape(S, B, D)


if __name__ == "__main__":
    d_model = 32
    max_len = 5000
    dropout_p = 0.1
    S, B = 8, 2

    root = jax.random.PRNGKey(0)
    kx, kdrop = jax.random.split(root)
    x = jax.random.normal(kx, (S, B, d_model), dtype=jnp.float32)
    pe = make_pe(d_model, max_len=max_len)
    ref = x + pe[:S][:, None, :]

    # 1) Eval mode: dropout is identity -> exact x + pe[:S].
    out_eval = jax.block_until_ready(
        positional_encoding_forward(x, pe, p=dropout_p, training=False))
    assert out_eval.shape == x.shape and out_eval.dtype == x.dtype
    assert jnp.allclose(out_eval, ref, atol=1e-6, rtol=1e-6)

    # 2) Training mode: inverted dropout, verified bit-for-bit against the
    #    same host-generated random bits.
    out_train = jax.block_until_ready(
        positional_encoding_forward(x, pe, p=dropout_p, training=True, key=kdrop))
    bits = jax.random.bits(kdrop, (S, B * d_model), dtype=jnp.uint32)
    bits = bits.reshape(S, B, d_model)
    thr = jnp.uint32(min(int(round(dropout_p * (1 << 32))), (1 << 32) - 1))
    expect = jnp.where(bits >= thr, ref * (1.0 / (1.0 - dropout_p)), 0.0)
    assert out_train.shape == x.shape
    assert jnp.allclose(out_train, expect, atol=1e-5, rtol=1e-5)

    # 3) Multi-step grid with a masked (non-divisible) last block.
    S2 = 20
    x_big = jax.random.normal(kx, (S2, B, d_model), dtype=jnp.float32)
    out_big = jax.block_until_ready(
        positional_encoding_forward(x_big, pe, p=dropout_p, training=False))
    ref_big = x_big + pe[:S2][:, None, :]
    assert jnp.allclose(out_big, ref_big, atol=1e-6, rtol=1e-6)

    print("KERNEL_OK")
</pallas_src>

<mosaic_0001>
module attributes {stable_mosaic.version = 11 : i64} {
  func.func @_pe_add_dropout_kernel(%arg0: i32, %arg1: memref<8x64xf32, #tpu.memory_space<vmem>>, %arg2: memref<8x32xf32, #tpu.memory_space<vmem>>, %arg3: memref<8x64xf32, #tpu.memory_space<vmem>>) attributes {dimension_semantics = [#tpu.dimension_semantics<parallel>], iteration_bounds = array<i64: 1>, scalar_prefetch = 0 : i64, scratch_operands = 0 : i64, tpu.core_type = #tpu.core_type<tc>, window_params = [{transform_indices = @transform_0, window_bounds = array<i64: 8, 64>}, {transform_indices = @transform_1, window_bounds = array<i64: 8, 32>}, {transform_indices = @transform_2, window_bounds = array<i64: 8, 64>}]} {
    %c0 = arith.constant 0 : index
    %c0_0 = arith.constant 0 : index
    %0 = vector.load %arg1[%c0, %c0_0] : memref<8x64xf32, #tpu.memory_space<vmem>>, vector<8x64xf32>
    %c0_1 = arith.constant 0 : index
    %c0_2 = arith.constant 0 : index
    %1 = vector.load %arg2[%c0_1, %c0_2] : memref<8x32xf32, #tpu.memory_space<vmem>>, vector<8x32xf32>
    %2 = tpu.concatenate %1, %1 in 1 : vector<8x32xf32>, vector<8x32xf32> -> vector<8x64xf32>
    %3 = arith.addf %0, %2 : vector<8x64xf32>
    %c0_3 = arith.constant 0 : index
    %c0_4 = arith.constant 0 : index
    %4 = vector.load %arg3[%c0_3, %c0_4] : memref<8x64xf32, #tpu.memory_space<vmem>>, vector<8x64xf32>
    tpu.vector_store %arg3[%c0_3, %c0_4], %3 {strides = array<i32>} : memref<8x64xf32, #tpu.memory_space<vmem>>, vector<8x64xf32>,
    return
  }
  func.func @transform_0(%arg0: i32) -> (i32, i32) {
    %c0_i32 = arith.constant 0 : i32
    %c0_i32_0 = arith.constant 0 : i32
    return %arg0, %c0_i32 : i32, i32
  }
  func.func @transform_1(%arg0: i32) -> (i32, i32) {
    %c0_i32 = arith.constant 0 : i32
    %c0_i32_0 = arith.constant 0 : i32
    return %arg0, %c0_i32 : i32, i32
  }
  func.func @transform_2(%arg0: i32) -> (i32, i32) {
    %c0_i32 = arith.constant 0 : i32
    %c0_i32_0 = arith.constant 0 : i32
    return %arg0, %c0_i32 : i32, i32
  }
}

</mosaic_0001>

<llo_original>
// kernel: tpu_custom_call.1
$region0: #{tpu_custom_call.1}
  #allocation0 [shape = 'u32[]', space=smem, size = 0x4, offset = 0x4, fixed_abs, tag = 'smem constant byte address 0x4 - core index']
  #allocation1 [shape = 'u32[144,128]{1,0:T(1,128)}', space=vmem, size = 0x12000, scoped, tag = 'internal scratch']
  %s0 = inlined_call_operand.hbm [shape: f32[8,64], index: 0, kind: input, shape index: {}]
  %s1 = inlined_call_operand.hbm [shape: f32[8,32], index: 1, kind: input, shape index: {}]
  %s2 = inlined_call_operand.hbm [shape: f32[8,64], index: 2, kind: output, shape index: {}]
  %s3 = sld [smem:[#allocation0]]
  $region26: #{tpu_custom_call.1} parent=0
    _
  %s5 = ssub.s32 1, %s3
  %s6 = scalar_select 0, %s5, %s3
  $region1: #{tpu_custom_call.1} parent=0
    #allocation2 [shape = 'u8[4096]{0}', space=vmem, size = 0x1000, scoped, tag = 'input window, operand 0, single buffered']
    #allocation3 [shape = 's32[1]{0}', space=sflag, size = 0x4, scoped, tag = 'scoped memory for tpu_custom_call.1']
    #allocation4 [shape = 's32[1]{0}', space=sflag, size = 0x4, scoped, tag = 'scoped memory for tpu_custom_call.1']
    #allocation5 [shape = 'u8[4096]{0}', space=vmem, size = 0x1000, scoped, tag = 'input window, operand 1, single buffered']
    #allocation6 [shape = 's32[1]{0}', space=sflag, size = 0x4, scoped, tag = 'scoped memory for tpu_custom_call.1']
    #allocation7 [shape = 'u8[4096]{0}', space=vmem, size = 0x1000, scoped, tag = 'output window, operand 0, single buffered']
    %7 = vsyncpa [#allocation3], 0
    %8 = vsyncpa [#allocation6], 0
    %9 = vsyncpa [#allocation4], 0
    // Predicated region
    $region2: #{tpu_custom_call.1} parent=1 // pred_check
      _
    $region3: #{tpu_custom_call.1} parent=1 // pred_check_branch
      %11 = sbr.rel (0) target = $region5
    $region4: #{tpu_custom_call.1} parent=1 // pred_region
      %s13 = ssub.s32 128, 128
      %14 = vsyncadd [#allocation3], %s13
      %s16 = sshll.u32 [#allocation2], 4
      %s17 = int_to_ptr.vmem [resolvable:$true] %s16
      %19 = dma.hbm_to_vmem [thread:$0]  %s0, 128, %s17, [#allocation3]
    $region5: #{tpu_custom_call.1} parent=1 // pred_fallthru
      _
    // Predicated region
    $region6: #{tpu_custom_call.1} parent=1 // pred_check
      _
    $region7: #{tpu_custom_call.1} parent=1 // pred_check_branch
      %21 = sbr.rel (0) target = $region9
    $region8: #{tpu_custom_call.1} parent=1 // pred_region
      %s23 = ssub.s32 128, 128
      %24 = vsyncadd [#allocation6], %s23
      %s26 = sshll.u32 [#allocation5], 4
      %s27 = int_to_ptr.vmem [resolvable:$true] %s26
      %29 = dma.hbm_to_vmem [thread:$0]  %s1, 128, %s27, [#allocation6]
    $region9: #{tpu_custom_call.1} parent=1 // pred_fallthru
      _
    // Predicated region
    $region10: #{tpu_custom_call.1} parent=1 // pred_check
      _
    $region11: #{tpu_custom_call.1} parent=1 // pred_check_branch
      %31 = sbr.rel (0) target = $region13
    $region12: #{tpu_custom_call.1} parent=1 // pred_region
      %32 = dma.done [#allocation3], 128
    $region13: #{tpu_custom_call.1} parent=1 // pred_fallthru
      _
    // Predicated region
    $region14: #{tpu_custom_call.1} parent=1 // pred_check
      _
    $region15: #{tpu_custom_call.1} parent=1 // pred_check_branch
      %34 = sbr.rel (0) target = $region17
    $region16: #{tpu_custom_call.1} parent=1 // pred_region
      %35 = dma.done [#allocation6], 128
    $region17: #{tpu_custom_call.1} parent=1 // pred_fallthru
      _
    %v36 = vld [vmem:[#allocation2] sm:$0xff]
    %v37 = vld [vmem:[#allocation5] sm:$0xff]
    %39 = vrot.lane.b32.xlu0 %v37, 32
    %v40 = vpop.permute.xlu0 %39
    %vm42 = vcmask 261120
    %v43 = vsel %vm42, %v37, %v40
    %v44 = vadd.f32 %v36, %v43
    %vm45 = vcmask 523264
    %46 = vst.msk [vmem:[#allocation7] sm:$0xff] %vm45, %v44
    // Predicated region
    $region18: #{tpu_custom_call.1} parent=1 // pred_check
      _
    $region19: #{tpu_custom_call.1} parent=1 // pred_check_branch
      %48 = sbr.rel (0) target = $region21
    $region20: #{tpu_custom_call.1} parent=1 // pred_region
      %s50 = ssub.s32 128, 128
      %51 = vsyncadd [#allocation4], %s50
      %s53 = sshll.u32 [#allocation7], 4
      %s54 = int_to_ptr.vmem [resolvable:$true] %s53
      %56 = dma.vmem_to_hbm [thread:$0]  %s54, 128, %s2, [#allocation4]
    $region21: #{tpu_custom_call.1} parent=1 // pred_fallthru
      _
    // Predicated region
    $region22: #{tpu_custom_call.1} parent=1 // pred_check
      _
    $region23: #{tpu_custom_call.1} parent=1 // pred_check_branch
      %58 = sbr.rel (0) target = $region25
    $region24: #{tpu_custom_call.1} parent=1 // pred_region
      %59 = dma.done [#allocation4], 128
    $region25: #{tpu_custom_call.1} parent=1 // pred_fallthru
      _
    %60 = vsyncpa [#allocation3], 1
    %61 = vsyncpa [#allocation6], 1
    %62 = vsyncpa [#allocation4], 1

</llo_original>
